<compile_context>
chip_gen: v7x
topology: tpu7x:2x2x1
jax: 0.10.0
libtpu: 0.0.40
codegen_flags: <defaults>
</compile_context>

<pallas_src>
import functools

import jax
import jax.numpy as jnp
from jax import lax
from jax.experimental import pallas as pl
from jax.experimental.pallas import tpu as pltpu


# ----------------------------------------------------------------------------
# Tiling helpers.
# ----------------------------------------------------------------------------
def _round_up(x, m):
    return (x + m - 1) // m * m


def _row_tile(M, target=256):
    """Sublane (row) tile + padded row count.

    Prefers large 8-aligned tiles with <=~12.5% padding instead of collapsing
    to tiny exact divisors for awkward M (e.g. B*S = 32*77)."""
    mp8 = _round_up(M, 8)
    if mp8 <= target:
        return mp8, mp8
    for t in (target, 128, 64, 32, 16, 8):
        mp = _round_up(M, t)
        if mp - M <= max(M // 8, 8):
            return t, mp
    return 8, mp8


def _col_tile(N, target=512):
    """Lane (column) tile: multiple of 128 dividing N, else the full dim."""
    if N <= target:
        return N
    for t in (target, 256, 128):
        if N % t == 0:
            return t
    return N


def _head_group(H, hd, max_lanes=256):
    """Largest head-group size Hb (dividing H) with Hb*hd % 128 == 0 and
    Hb*hd <= max_lanes.  None -> fall back to an all-heads-per-batch block."""
    best = None
    for hb in range(1, H + 1):
        if H % hb:
            continue
        w = hb * hd
        if w % 128 == 0 and w <= max_lanes:
            best = hb
    return best


# ----------------------------------------------------------------------------
# Fused [LayerNorm] -> matmul -> +bias -> [activation] -> [+residual] kernel.
# Full-K x/w tiles (no reduction grid axis), f32 accumulation/epilogue.
# ----------------------------------------------------------------------------
def _mm_kernel(*refs, activation, has_residual, has_ln, eps):
    x_ref, w_ref, b_ref = refs[0], refs[1], refs[2]
    i = 3
    if has_ln:
        g_ref, be_ref = refs[i], refs[i + 1]
        i += 2
    if has_residual:
        r_ref = refs[i]
        i += 1
    o_ref = refs[i]

    x = x_ref[...]
    if has_ln:
        xf = x.astype(jnp.float32)
        mean = jnp.mean(xf, axis=-1, keepdims=True)
        xc = xf - mean
        var = jnp.mean(xc * xc, axis=-1, keepdims=True)
        xn = xc * lax.rsqrt(var + eps)
        x = (xn * g_ref[...] + be_ref[...]).astype(w_ref.dtype)

    out = jnp.dot(x, w_ref[...], preferred_element_type=jnp.float32)
    out = out + b_ref[...]
    if activation == "quick_gelu":
        out = out * jax.nn.sigmoid(1.702 * out)
    elif activation == "gelu":
        out = jax.nn.gelu(out)
    if has_residual:
        out = out + r_ref[...].astype(jnp.float32)
    o_ref[...] = out.astype(o_ref.dtype)


def fused_matmul(x, w, b, *, gamma=None, beta=None, residual=None,
                 activation="none", eps=1e-5):
    """out = act([LN(x)] @ w + b) [+ residual], row-padded if needed."""
    M, K = x.shape
    K2, N = w.shape
    assert K == K2
    out_dtype = x.dtype
    tm, mp = _row_tile(M)
    tn = _col_tile(N)
    if mp != M:
        x = jnp.pad(x, ((0, mp - M), (0, 0)))
        if residual is not None:
            residual = jnp.pad(residual, ((0, mp - M), (0, 0)))
    grid = (mp // tm, N // tn)

    in_specs = [
        pl.BlockSpec((tm, K), lambda i, j: (i, 0)),
        pl.BlockSpec((K, tn), lambda i, j: (0, j)),
        pl.BlockSpec((1, tn), lambda i, j: (0, j)),
    ]
    args = [x, w, b.reshape(1, N).astype(jnp.float32)]
    has_ln = gamma is not None
    if has_ln:
        in_specs += [pl.BlockSpec((1, K), lambda i, j: (0, 0)),
                     pl.BlockSpec((1, K), lambda i, j: (0, 0))]
        args += [gamma.reshape(1, K).astype(jnp.float32),
                 beta.reshape(1, K).astype(jnp.float32)]
    has_res = residual is not None
    if has_res:
        in_specs.append(pl.BlockSpec((tm, tn), lambda i, j: (i, j)))
        args.append(residual)

    out = pl.pallas_call(
        functools.partial(_mm_kernel, activation=activation,
                          has_residual=has_res, has_ln=has_ln, eps=eps),
        out_shape=jax.ShapeDtypeStruct((mp, N), out_dtype),
        grid_spec=pltpu.PrefetchScalarGridSpec(
            num_scalar_prefetch=0,
            grid=grid,
            in_specs=in_specs,
            out_specs=pl.BlockSpec((tm, tn), lambda i, j: (i, j)),
        ),
        compiler_params=pltpu.CompilerParams(
            dimension_semantics=("parallel", "parallel")),
    )(*args)
    if mp != M:
        out = out[:M]
    return out


# ----------------------------------------------------------------------------
# Attention core on the packed QKV tensor: softmax(q k^T + mask) v per head.
# q is pre-scaled (scale folded into the q projection).
# ----------------------------------------------------------------------------
def _attention_kernel(*refs, hd, nheads, offs, split_qkv, has_mask,
                      approx_recip):
    if split_qkv:
        qb, kb, vb = refs[0][0], refs[1][0], refs[2][0]
        i = 3
    else:
        blk = refs[0][0]
        qb = kb = vb = blk
        i = 1
    if has_mask:
        m = refs[i][0, 0]
        i += 1
    o_ref = refs[i]

    qo, ko, vo = offs
    outs = []
    for h in range(nheads):
        q = qb[:, qo + h * hd: qo + (h + 1) * hd]
        k = kb[:, ko + h * hd: ko + (h + 1) * hd]
        v = vb[:, vo + h * hd: vo + (h + 1) * hd]
        s = lax.dot_general(q, k, (((1,), (1,)), ((), ())),
                            preferred_element_type=jnp.float32)
        if has_mask:
            s = s + m
        s = s - jnp.max(s, axis=-1, keepdims=True)
        p = jnp.exp(s)
        denom = jnp.sum(p, axis=-1, keepdims=True)
        if approx_recip:
            p = p * pl.reciprocal(denom, approx=True)
        else:
            p = p / denom
        outs.append(jnp.dot(p.astype(v.dtype), v,
                            preferred_element_type=jnp.float32))
    o = outs[0] if nheads == 1 else jnp.concatenate(outs, axis=-1)
    o_ref[0] = o.astype(o_ref.dtype)


def attention_core(qkv2d, mask, *, B, S, D, H):
    """qkv2d: (B*S, 3D) packed [Q|K|V]; mask: None or (1|B, 1, S, S) additive.
    Returns (B*S, D)."""
    hd = D // H
    dtype = qkv2d.dtype
    approx = dtype != jnp.float32
    qkv = qkv2d.reshape(B, S, 3 * D)          # free reshape, no data movement
    hb = _head_group(H, hd)
    has_mask = mask is not None
    if has_mask:
        mask = mask.astype(jnp.float32)
        m_b = mask.shape[0]

    if hb is not None:
        # Lane-aligned head groups: grid (B, H // hb), blocks (1, S, hb*hd).
        G = H // hb
        W = hb * hd
        grid = (B, G)
        in_specs = [
            pl.BlockSpec((1, S, W), lambda b, g: (b, 0, g)),
            pl.BlockSpec((1, S, W), lambda b, g: (b, 0, G + g)),
            pl.BlockSpec((1, S, W), lambda b, g: (b, 0, 2 * G + g)),
        ]
        args = [qkv, qkv, qkv]
        if has_mask:
            if m_b > 1:
                in_specs.append(
                    pl.BlockSpec((1, 1, S, S), lambda b, g: (b, 0, 0, 0)))
            else:
                in_specs.append(
                    pl.BlockSpec((1, 1, S, S), lambda b, g: (0, 0, 0, 0)))
            args.append(mask)
        out_spec = pl.BlockSpec((1, S, W), lambda b, g: (b, 0, g))
        dims = ("parallel", "parallel")
        nheads, offs, split = hb, (0, 0, 0), True
    else:
        # Fallback: one full-width (S, 3D) block per batch element.
        grid = (B,)
        in_specs = [pl.BlockSpec((1, S, 3 * D), lambda b: (b, 0, 0))]
        args = [qkv]
        if has_mask:
            if m_b > 1:
                in_specs.append(
                    pl.BlockSpec((1, 1, S, S), lambda b: (b, 0, 0, 0)))
            else:
                in_specs.append(
                    pl.BlockSpec((1, 1, S, S), lambda b: (0, 0, 0, 0)))
            args.append(mask)
        out_spec = pl.BlockSpec((1, S, D), lambda b: (b, 0, 0))
        dims = ("parallel",)
        nheads, offs, split = H, (0, D, 2 * D), False

    out = pl.pallas_call(
        functools.partial(_attention_kernel, hd=hd, nheads=nheads, offs=offs,
                          split_qkv=split, has_mask=has_mask,
                          approx_recip=approx),
        out_shape=jax.ShapeDtypeStruct((B, S, D), dtype),
        grid_spec=pltpu.PrefetchScalarGridSpec(
            num_scalar_prefetch=0, grid=grid, in_specs=in_specs,
            out_specs=out_spec),
        compiler_params=pltpu.CompilerParams(dimension_semantics=dims),
    )(*args)
    return out.reshape(B * S, D)


# ----------------------------------------------------------------------------
# One CLIPEncoderLayer and the full CLIPEncoder (prompt_type=None path).
# ----------------------------------------------------------------------------
def clip_encoder_layer(x2, p, *, B, S, num_heads, mask,
                       hidden_act="quick_gelu"):
    D = x2.shape[-1]
    # --- self-attention block (LN1 fused into the QKV matmul) ---
    qkv = fused_matmul(x2, p["w_qkv"], p["b_qkv"],
                       gamma=p["ln1_g"], beta=p["ln1_b"])        # (B*S, 3D)
    attn = attention_core(qkv, mask, B=B, S=S, D=D, H=num_heads)  # (B*S, D)
    x2 = fused_matmul(attn, p["w_out"], p["b_out"], residual=x2)
    # --- MLP block (LN2 fused into fc1) ---
    h = fused_matmul(x2, p["w_fc1"], p["b_fc1"],
                     gamma=p["ln2_g"], beta=p["ln2_b"], activation=hidden_act)
    x2 = fused_matmul(h, p["w_fc2"], p["b_fc2"], residual=x2)
    return x2


def clip_encoder(inputs_embeds, layer_params, *, num_heads,
                 attention_mask=None, causal_attention_mask=None,
                 hidden_act="quick_gelu", compute_dtype=None):
    """Matches CLIPEncoder.forward (prompt_type=None, eval mode).

    Returns only last_hidden_state (output_attentions / output_hidden_states
    collection is a host-side tuple concern, not a kernel concern)."""
    B, S, D = inputs_embeds.shape
    mask = None
    for m in (causal_attention_mask, attention_mask):
        if m is not None:
            m = m.astype(jnp.float32)
            mask = m if mask is None else mask + m     # (1|B, 1, S, S)

    if compute_dtype is None:
        compute_dtype = layer_params[0]["w_qkv"].dtype
    h2 = inputs_embeds.reshape(B * S, D).astype(compute_dtype)
    for p in layer_params:
        h2 = clip_encoder_layer(h2, p, B=B, S=S, num_heads=num_heads,
                                mask=mask, hidden_act=hidden_act)
    return h2.reshape(B, S, D).astype(inputs_embeds.dtype)


# ----------------------------------------------------------------------------
# Parameter helpers (torch nn.Linear layout -> kernel layout) and pure-JAX ref.
# ----------------------------------------------------------------------------
def make_kernel_params(raw, num_heads, hidden, compute_dtype=jnp.bfloat16):
    scale = (hidden // num_heads) ** (-0.5)
    w_qkv = jnp.concatenate(
        [raw["Wq"].T * scale, raw["Wk"].T, raw["Wv"].T], axis=1)
    b_qkv = jnp.concatenate([raw["bq"] * scale, raw["bk"], raw["bv"]])
    cast = lambda t: t.astype(compute_dtype)
    f32 = lambda t: t.astype(jnp.float32)
    return dict(
        ln1_g=f32(raw["ln1_g"]), ln1_b=f32(raw["ln1_b"]),
        w_qkv=cast(w_qkv), b_qkv=f32(b_qkv),
        w_out=cast(raw["Wo"].T), b_out=f32(raw["bo"]),
        ln2_g=f32(raw["ln2_g"]), ln2_b=f32(raw["ln2_b"]),
        w_fc1=cast(raw["W1"].T), b_fc1=f32(raw["b1"]),
        w_fc2=cast(raw["W2"].T), b_fc2=f32(raw["b2"]),
    )


def ref_encoder(x, raw_layers, num_heads, mask, eps=1e-5):
    B, S, D = x.shape
    hd = D // num_heads
    scale = hd ** (-0.5)

    def ln(t, g, b):
        mean = t.mean(-1, keepdims=True)
        var = ((t - mean) ** 2).mean(-1, keepdims=True)
        return (t - mean) / jnp.sqrt(var + eps) * g + b

    def shape_heads(t):
        return t.reshape(B, S, num_heads, hd).transpose(0, 2, 1, 3)

    for p in raw_layers:
        residual = x
        h = ln(x, p["ln1_g"], p["ln1_b"])
        q = (h @ p["Wq"].T + p["bq"]) * scale
        k = h @ p["Wk"].T + p["bk"]
        v = h @ p["Wv"].T + p["bv"]
        q, k, v = shape_heads(q), shape_heads(k), shape_heads(v)
        w = jnp.einsum("bhqd,bhkd->bhqk", q, k) + mask
        w = jax.nn.softmax(w, axis=-1)
        a = jnp.einsum("bhqk,bhkd->bhqd", w, v)
        a = a.transpose(0, 2, 1, 3).reshape(B, S, D)
        a = a @ p["Wo"].T + p["bo"]
        x = residual + a
        residual = x
        h = ln(x, p["ln2_g"], p["ln2_b"])
        h = h @ p["W1"].T + p["b1"]
        h = h * jax.nn.sigmoid(1.702 * h)          # quick_gelu
        h = h @ p["W2"].T + p["b2"]
        x = residual + h
    return x


def init_raw_layer(key, D, ffn):
    ks = jax.random.split(key, 10)

    def lin(k, out_dim, in_dim):
        kw, kb = jax.random.split(k)
        W = jax.random.normal(kw, (out_dim, in_dim), jnp.float32) * 0.02
        b = jax.random.normal(kb, (out_dim,), jnp.float32) * 0.02
        return W, b

    Wq, bq = lin(ks[0], D, D)
    Wk, bk = lin(ks[1], D, D)
    Wv, bv = lin(ks[2], D, D)
    Wo, bo = lin(ks[3], D, D)
    W1, b1 = lin(ks[4], ffn, D)
    W2, b2 = lin(ks[5], D, ffn)
    ln1_g = 1.0 + 0.1 * jax.random.normal(ks[6], (D,), jnp.float32)
    ln1_b = 0.1 * jax.random.normal(ks[7], (D,), jnp.float32)
    ln2_g = 1.0 + 0.1 * jax.random.normal(ks[8], (D,), jnp.float32)
    ln2_b = 0.1 * jax.random.normal(ks[9], (D,), jnp.float32)
    return dict(Wq=Wq, bq=bq, Wk=Wk, bk=bk, Wv=Wv, bv=bv, Wo=Wo, bo=bo,
                W1=W1, b1=b1, W2=W2, b2=b2,
                ln1_g=ln1_g, ln1_b=ln1_b, ln2_g=ln2_g, ln2_b=ln2_b)


if __name__ == "__main__":
    def run_case(B, S, D, H, ffn, L, key, dtype_checks):
        kx, *klayers = jax.random.split(key, L + 1)
        x = jax.random.normal(kx, (B, S, D), jnp.float32)
        raw = [init_raw_layer(k, D, ffn) for k in klayers]

        # Causal mask (CLIP text encoder style), kept at batch=1 so it is
        # DMA'd once and stays resident in the attention kernel.
        row = jnp.arange(S)
        causal = jnp.where(row[None, :] <= row[:, None], 0.0, -1e9)
        causal = causal.astype(jnp.float32)[None, None]      # (1, 1, S, S)

        ref = ref_encoder(x, raw, H, causal)
        for dt, atol, rtol in dtype_checks:
            params = [make_kernel_params(r, H, D, compute_dtype=dt)
                      for r in raw]
            out = clip_encoder(x, params, num_heads=H,
                               causal_attention_mask=causal)
            out = jax.block_until_ready(out)
            assert out.shape == (B, S, D)
            assert out.dtype == jnp.float32
            err = float(jnp.max(jnp.abs(out - ref)))
            assert jnp.allclose(out, ref, atol=atol, rtol=rtol), (str(dt), err)

    root = jax.random.PRNGKey(0)
    k1, k2 = jax.random.split(root)

    # Config 1: hidden=32, heads=4 (head_dim=8) -> all-heads-per-block
    # attention path; checked in f32 (tight) and bf16 (perf path, loose).
    run_case(2, 8, 32, 4, 64, 2, k1,
             [(jnp.float32, 2e-4, 2e-4), (jnp.bfloat16, 5e-2, 5e-2)])

    # Config 2: hidden=128, heads=2 (head_dim=64) -> 128-lane head-group
    # attention path, bf16 compute.
    run_case(2, 8, 128, 2, 256, 1, k2,
             [(jnp.bfloat16, 5e-2, 5e-2)])

    print("KERNEL_OK")
</pallas_src>

<mosaic_0001>
module attributes {stable_mosaic.version = 11 : i64} {
  func.func @_mm_kernel(%arg0: i32, %arg1: i32, %arg2: memref<16x32xf32, #tpu.memory_space<vmem>>, %arg3: memref<32x96xf32, #tpu.memory_space<vmem>>, %arg4: memref<1x96xf32, #tpu.memory_space<vmem>>, %arg5: memref<1x32xf32, #tpu.memory_space<vmem>>, %arg6: memref<1x32xf32, #tpu.memory_space<vmem>>, %arg7: memref<16x96xf32, #tpu.memory_space<vmem>>) attributes {dimension_semantics = [#tpu.dimension_semantics<parallel>, #tpu.dimension_semantics<parallel>], iteration_bounds = array<i64: 1, 1>, scalar_prefetch = 0 : i64, scratch_operands = 0 : i64, tpu.core_type = #tpu.core_type<tc>, window_params = [{transform_indices = @transform_0, window_bounds = array<i64: 16, 32>}, {transform_indices = @transform_1, window_bounds = array<i64: 32, 96>}, {transform_indices = @transform_2, window_bounds = array<i64: 1, 96>}, {pipeline_mode = #tpu.pipeline_mode<synchronous>, transform_indices = @transform_3, window_bounds = array<i64: 1, 32>}, {pipeline_mode = #tpu.pipeline_mode<synchronous>, transform_indices = @transform_4, window_bounds = array<i64: 1, 32>}, {transform_indices = @transform_5, window_bounds = array<i64: 16, 96>}]} {
    %c0 = arith.constant 0 : index
    %c0_0 = arith.constant 0 : index
    %0 = vector.load %arg2[%c0, %c0_0] : memref<16x32xf32, #tpu.memory_space<vmem>>, vector<16x32xf32>
    %cst = arith.constant dense<0.000000e+00> : vector<16xf32>
    %1 = vector.multi_reduction <add>, %0, %cst [1] : vector<16x32xf32> to vector<16xf32>
    %2 = vector.shape_cast %1 : vector<16xf32> to vector<16x1xf32>
    %cst_1 = arith.constant 3.200000e+01 : f32
    %3 = vector.broadcast %cst_1 : f32 to vector<16x1xf32>
    %4 = arith.divf %2, %3 : vector<16x1xf32>
    %5 = vector.broadcast %4 : vector<16x1xf32> to vector<16x32xf32>
    %6 = arith.subf %0, %5 : vector<16x32xf32>
    %7 = arith.mulf %6, %6 : vector<16x32xf32>
    %cst_2 = arith.constant dense<0.000000e+00> : vector<16xf32>
    %8 = vector.multi_reduction <add>, %7, %cst_2 [1] : vector<16x32xf32> to vector<16xf32>
    %9 = vector.shape_cast %8 : vector<16xf32> to vector<16x1xf32>
    %cst_3 = arith.constant 3.200000e+01 : f32
    %10 = vector.broadcast %cst_3 : f32 to vector<16x1xf32>
    %11 = arith.divf %9, %10 : vector<16x1xf32>
    %cst_4 = arith.constant 9.99999974E-6 : f32
    %12 = vector.broadcast %cst_4 : f32 to vector<16x1xf32>
    %13 = arith.addf %11, %12 : vector<16x1xf32>
    %14 = math.rsqrt %13 : vector<16x1xf32>
    %15 = vector.broadcast %14 : vector<16x1xf32> to vector<16x32xf32>
    %16 = arith.mulf %6, %15 : vector<16x32xf32>
    %c0_5 = arith.constant 0 : index
    %c0_6 = arith.constant 0 : index
    %17 = vector.load %arg5[%c0_5, %c0_6] : memref<1x32xf32, #tpu.memory_space<vmem>>, vector<1x32xf32>
    %18 = vector.broadcast %17 : vector<1x32xf32> to vector<16x32xf32>
    %19 = arith.mulf %16, %18 : vector<16x32xf32>
    %c0_7 = arith.constant 0 : index
    %c0_8 = arith.constant 0 : index
    %20 = vector.load %arg6[%c0_7, %c0_8] : memref<1x32xf32, #tpu.memory_space<vmem>>, vector<1x32xf32>
    %21 = vector.broadcast %20 : vector<1x32xf32> to vector<16x32xf32>
    %22 = arith.addf %19, %21 : vector<16x32xf32>
    %c0_9 = arith.constant 0 : index
    %c0_10 = arith.constant 0 : index
    %23 = vector.load %arg3[%c0_9, %c0_10] : memref<32x96xf32, #tpu.memory_space<vmem>>, vector<32x96xf32>
    %cst_11 = arith.constant dense<0.000000e+00> : vector<16x96xf32>
    %24 = tpu.matmul %22, %23, %cst_11 {dimension_numbers = #tpu.dot_dimension_numbers<[1], [0], [0], [1], [0, 0, 1, 1], [], []>} : vector<16x32xf32>, vector<32x96xf32>, vector<16x96xf32> -> vector<16x96xf32>
    %c0_12 = arith.constant 0 : index
    %c0_13 = arith.constant 0 : index
    %25 = vector.load %arg4[%c0_12, %c0_13] : memref<1x96xf32, #tpu.memory_space<vmem>>, vector<1x96xf32>
    %26 = vector.broadcast %25 : vector<1x96xf32> to vector<16x96xf32>
    %27 = arith.addf %24, %26 : vector<16x96xf32>
    %c0_14 = arith.constant 0 : index
    %c0_15 = arith.constant 0 : index
    %28 = vector.load %arg7[%c0_14, %c0_15] : memref<16x96xf32, #tpu.memory_space<vmem>>, vector<16x96xf32>
    tpu.vector_store %arg7[%c0_14, %c0_15], %27 {strides = array<i32>} : memref<16x96xf32, #tpu.memory_space<vmem>>, vector<16x96xf32>,
    return
  }
  func.func @transform_0(%arg0: i32, %arg1: i32) -> (i32, i32) {
    %c0_i32 = arith.constant 0 : i32
    %c0_i32_0 = arith.constant 0 : i32
    return %arg0, %c0_i32 : i32, i32
  }
  func.func @transform_1(%arg0: i32, %arg1: i32) -> (i32, i32) {
    %c0_i32 = arith.constant 0 : i32
    %c0_i32_0 = arith.constant 0 : i32
    return %c0_i32, %arg1 : i32, i32
  }
  func.func @transform_2(%arg0: i32, %arg1: i32) -> (i32, i32) {
    %c0_i32 = arith.constant 0 : i32
    %c0_i32_0 = arith.constant 0 : i32
    return %c0_i32, %arg1 : i32, i32
  }
  func.func @transform_3(%arg0: i32, %arg1: i32) -> (i32, i32) {
    %c0_i32 = arith.constant 0 : i32
    %c0_i32_0 = arith.constant 0 : i32
    %c0_i32_1 = arith.constant 0 : i32
    return %c0_i32, %c0_i32_0 : i32, i32
  }
  func.func @transform_4(%arg0: i32, %arg1: i32) -> (i32, i32) {
    %c0_i32 = arith.constant 0 : i32
    %c0_i32_0 = arith.constant 0 : i32
    %c0_i32_1 = arith.constant 0 : i32
    return %c0_i32, %c0_i32_0 : i32, i32
  }
  func.func @transform_5(%arg0: i32, %arg1: i32) -> (i32, i32) {
    %c0_i32 = arith.constant 0 : i32
    return %arg0, %arg1 : i32, i32
  }
}

</mosaic_0001>

<llo_original>
// kernel: tpu_custom_call.1
$region0: #{tpu_custom_call.1}
  #allocation0 [shape = 'u32[]', space=smem, size = 0x4, offset = 0x4, fixed_abs, tag = 'smem constant byte address 0x4 - core index']
  #allocation1 [shape = 'u32[144,128]{1,0:T(1,128)}', space=vmem, size = 0x12000, scoped, tag = 'internal scratch']
  %s0 = inlined_call_operand.hbm [shape: f32[16,32], index: 0, kind: input, shape index: {}]
  %s1 = inlined_call_operand.hbm [shape: f32[32,96], index: 1, kind: input, shape index: {}]
  %s2 = inlined_call_operand.vmem [shape: f32[1,96], index: 2, kind: input, shape index: {}]
  %s3 = inlined_call_operand.vmem [shape: f32[1,32], index: 3, kind: input, shape index: {}]
  %s4 = inlined_call_operand.vmem [shape: f32[1,32], index: 4, kind: input, shape index: {}]
  %s5 = inlined_call_operand.hbm [shape: f32[16,96], index: 5, kind: output, shape index: {}]
  %s6 = sld [smem:[#allocation0]]
  $region38: #{tpu_custom_call.1} parent=0
    _
  %s8 = ssub.s32 1, %s6
  %s9 = scalar_select 0, %s8, %s6
  $region1: #{tpu_custom_call.1} parent=0
    #allocation2 [shape = 'u8[8192]{0}', space=vmem, size = 0x2000, scoped, tag = 'input window, operand 0, single buffered']
    #allocation3 [shape = 's32[1]{0}', space=sflag, size = 0x4, scoped, tag = 'scoped memory for tpu_custom_call.1']
    #allocation4 [shape = 's32[1]{0}', space=sflag, size = 0x4, scoped, tag = 'scoped memory for tpu_custom_call.1']
    #allocation5 [shape = 'u8[16384]{0}', space=vmem, size = 0x4000, scoped, tag = 'input window, operand 1, single buffered']
    #allocation6 [shape = 's32[1]{0}', space=sflag, size = 0x4, scoped, tag = 'scoped memory for tpu_custom_call.1']
    #allocation7 [shape = 'u8[8192]{0}', space=vmem, size = 0x2000, scoped, tag = 'output window, operand 0, single buffered']
    %10 = vsyncpa [#allocation3], 0
    %11 = vsyncpa [#allocation6], 0
    %12 = vsyncpa [#allocation4], 0
    // Predicated region
    $region2: #{tpu_custom_call.1} parent=1 // pred_check
      _
    $region3: #{tpu_custom_call.1} parent=1 // pred_check_branch
      %14 = sbr.rel (0) target = $region5
    $region4: #{tpu_custom_call.1} parent=1 // pred_region
      %s16 = ssub.s32 256, 256
      %17 = vsyncadd [#allocation3], %s16
      %s18 = sshll.u32 [#allocation2], 4
      %s19 = int_to_ptr.vmem [resolvable:$true] %s18
      %24 = dma.hbm_to_vmem [thread:$0]  %s0, 256, %s19, [#allocation3], 128, 128, 8
    $region5: #{tpu_custom_call.1} parent=1 // pred_fallthru
      _
    // Predicated region
    $region6: #{tpu_custom_call.1} parent=1 // pred_check
      _
    $region7: #{tpu_custom_call.1} parent=1 // pred_check_branch
      %26 = sbr.rel (0) target = $region9
    $region8: #{tpu_custom_call.1} parent=1 // pred_region
      %s28 = ssub.s32 512, 512
      %29 = vsyncadd [#allocation6], %s28
      %s30 = sshll.u32 [#allocation5], 4
      %s31 = int_to_ptr.vmem [resolvable:$true] %s30
      %36 = dma.hbm_to_vmem [thread:$0]  %s1, 512, %s31, [#allocation6], 128, 128, 8
    $region9: #{tpu_custom_call.1} parent=1 // pred_fallthru
      _
    // Predicated region
    $region10: #{tpu_custom_call.1} parent=1 // pred_check
      _
    $region11: #{tpu_custom_call.1} parent=1 // pred_check_branch
      %38 = sbr.rel (0) target = $region13
    $region12: #{tpu_custom_call.1} parent=1 // pred_region
      _
    $region13: #{tpu_custom_call.1} parent=1 // pred_fallthru
      _
    // Predicated region
    $region14: #{tpu_custom_call.1} parent=1 // pred_check
      _
    $region15: #{tpu_custom_call.1} parent=1 // pred_check_branch
      %40 = sbr.rel (0) target = $region17
    $region16: #{tpu_custom_call.1} parent=1 // pred_region
      _
    $region17: #{tpu_custom_call.1} parent=1 // pred_fallthru
      _
    // Predicated region
    $region18: #{tpu_custom_call.1} parent=1 // pred_check
      _
    $region19: #{tpu_custom_call.1} parent=1 // pred_check_branch
      %42 = sbr.rel (0) target = $region21
    $region20: #{tpu_custom_call.1} parent=1 // pred_region
      _
    $region21: #{tpu_custom_call.1} parent=1 // pred_fallthru
      _
    // Predicated region
    $region22: #{tpu_custom_call.1} parent=1 // pred_check
      _
    $region23: #{tpu_custom_call.1} parent=1 // pred_check_branch
      %44 = sbr.rel (0) target = $region25
    $region24: #{tpu_custom_call.1} parent=1 // pred_region
      %45 = dma.done [#allocation3], 256
    $region25: #{tpu_custom_call.1} parent=1 // pred_fallthru
      _
    // Predicated region
    $region26: #{tpu_custom_call.1} parent=1 // pred_check
      _
    $region27: #{tpu_custom_call.1} parent=1 // pred_check_branch
      %47 = sbr.rel (0) target = $region29
    $region28: #{tpu_custom_call.1} parent=1 // pred_region
      %48 = dma.done [#allocation6], 512
    $region29: #{tpu_custom_call.1} parent=1 // pred_fallthru
      _
    %v49 = vld [vmem:[#allocation2] sm:$0xff]
    %v50 = vld [vmem:[#allocation2 + $0x8] sm:$0xff]
    %vm51 = vcmask 261120
    %v52 = vsel %vm51, %v49, 0.0
    %53 = vadd.xlane.f32.xlu0 %v52
    %v54 = vpop.xlane.xlu0 %53
    %v55 = vsel %vm51, %v50, 0.0
    %56 = vadd.xlane.f32.xlu0 %v55
    %v57 = vpop.xlane.xlu0 %56
    %v58 = vrcp.pop 32.0
    %v59 = vmul.f32 %v54, %v58
    %v60 = vmul.f32 %v57, %v58
    %v61 = vsub.f32 %v49, %v59
    %v62 = vsub.f32 %v50, %v60
    %v63 = vmul.f32 %v61, %v61
    %v64 = vmul.f32 %v62, %v62
    %v65 = vsel %vm51, %v63, 0.0
    %66 = vadd.xlane.f32.xlu0 %v65
    %v67 = vpop.xlane.xlu0 %66
    %v68 = vsel %vm51, %v64, 0.0
    %69 = vadd.xlane.f32.xlu0 %v68
    %v70 = vpop.xlane.xlu0 %69
    %v71 = vmul.f32 %v67, %v58
    %v72 = vmul.f32 %v70, %v58
    %v73 = vadd.f32 %v71, 1e-05
    %v74 = vadd.f32 %v72, 1e-05
    %v75 = vrsqrt.pop %v73
    %v76 = vrsqrt.pop %v74
    %v77 = vmul.f32 %v61, %v75
    %v78 = vmul.f32 %v62, %v76
    %v79 = vld [vmem:[%s3] sm:$0x1]
    %v81 = vlaneseq
    %v82 = vshrl.u32 %v81, 7
    %v83 = vsub.s32 0, %v82
    %v84 = vrot.slane %v79, %v83
    %v86 = vmul.f32 %v77, %v84
    %v87 = vmul.f32 %v78, %v84
    %v88 = vld [vmem:[%s4] sm:$0x1]
    %v90 = vlaneseq
    %v91 = vshrl.u32 %v90, 7
    %v92 = vsub.s32 0, %v91
    %v93 = vrot.slane %v88, %v92
    %v95 = vadd.f32 %v86, %v93
    %v96 = vadd.f32 %v87, %v93
    %v97 = vld [vmem:[#allocation5] sm:$0xff]
    %v98 = vld [vmem:[#allocation5 + $0x8] sm:$0xff]
    %v99 = vld [vmem:[#allocation5 + $0x10] sm:$0xff]
    %v100 = vld [vmem:[#allocation5 + $0x18] sm:$0xff]
    %v101 = vld [vmem:[%s2] sm:$0x1]
    %v103 = vlaneseq
    %v104 = vshrl.u32 %v103, 7
    %v105 = vsub.s32 0, %v104
    %v106 = vrot.slane %v101, %v105
    %v109 = vsel %vm51, %v95, 0
    %v112 = vsel %vm51, %v96, 0
    %114 = vmatprep.subr.mxu0 0.0
    %115 = vmatpush1.msra.mxu0 %v97
    %116 = vmatprep.subr.mxu0 0.0
    %117 = vmatpush1.msra.mxu0 %v98
    %118 = vmatprep.subr.mxu0 0.0
    %119 = vmatpush1.msra.mxu0 %v99
    %120 = vmatprep.subr.mxu0 0.0
    %121 = vmatpush1.msra.mxu0 %v100
    %122 = vmatprep.subr.mxu0 0.0
    %123 = vmatpush1.msra.mxu0 0.0
    %124 = vmatprep.subr.mxu0 0.0
    %125 = vmatpush1.msra.mxu0 0.0
    %126 = vmatprep.subr.mxu0 0.0
    %127 = vmatpush1.msra.mxu0 0.0
    %128 = vmatprep.subr.mxu0 0.0
    %129 = vmatpush1.msra.mxu0 0.0
    %130 = vmatprep.subr.mxu0 0.0
    %131 = vmatpush1.msra.mxu0 0.0
    %132 = vmatprep.subr.mxu0 0.0
    %133 = vmatpush1.msra.mxu0 0.0
    %134 = vmatprep.subr.mxu0 0.0
    %135 = vmatpush1.msra.mxu0 0.0
    %136 = vmatprep.subr.mxu0 0.0
    %137 = vmatpush1.msra.mxu0 0.0
    %138 = vmatprep.subr.mxu0 0.0
    %139 = vmatpush1.msra.mxu0 0.0
    %140 = vmatprep.subr.mxu0 0.0
    %141 = vmatpush1.msra.mxu0 0.0
    %142 = vmatprep.subr.mxu0 0.0
    %143 = vmatpush1.msra.mxu0 0.0
    %144 = vmatprep.subr.mxu0 0.0
    %145 = vmatpush1.msra.mxu0 0.0
    %146 = vmatprep.subr.mxu0 0.0
    %147 = vmatpush1.msra.mxu0 0.0
    %148 = vmatprep.subr.mxu0 0.0
    %149 = vmatpush1.msra.mxu0 0.0
    %150 = vmatprep.subr.mxu0 0.0
    %151 = vmatpush1.msra.mxu0 0.0
    %152 = vmatprep.subr.mxu0 0.0
    %153 = vmatpush1.msra.mxu0 0.0
    %154 = vmatprep.subr.mxu0 0.0
    %155 = vmatpush1.msra.mxu0 0.0
    %156 = vmatprep.subr.mxu0 0.0
    %157 = vmatpush1.msra.mxu0 0.0
    %158 = vmatprep.subr.mxu0 0.0
    %159 = vmatpush1.msra.mxu0 0.0
    %160 = vmatprep.subr.mxu0 0.0
    %161 = vmatpush1.msra.mxu0 0.0
    %162 = vmatprep.subr.mxu0 0.0
    %163 = vmatpush1.msra.mxu0 0.0
    %164 = vmatprep.subr.mxu0 0.0
    %165 = vmatpush1.msra.mxu0 0.0
    %166 = vmatprep.subr.mxu0 0.0
    %167 = vmatpush1.msra.mxu0 0.0
    %168 = vmatprep.subr.mxu0 0.0
    %169 = vmatpush1.msra.mxu0 0.0
    %170 = vmatprep.subr.mxu0 0.0
    %171 = vmatpush1.msra.mxu0 0.0
    %172 = vmatprep.subr.mxu0 0.0
    %173 = vmatpush1.msra.mxu0 0.0
    %174 = vmatprep.subr.mxu0 0.0
    %175 = vmatpush1.msra.mxu0 0.0
    %176 = vmatprep.subr.mxu0 0.0
    %177 = vmatpush1.msra.mxu0 0.0
    %178 = vmatprep.mubr.f32.mxu0 0.0
    %179 = vmatmul.mubr.f32.gmra.mrb[0].mxu0 %v109
    %v180 = vpop.f32.mrb[0].mxu0
    %v181 = vadd.f32 %v106, %v180
    %v182 = vpop.f32.mrb[0].mxu0
    %183 = vmatprep.mubr.f32.mxu0 0.0
    %184 = vmatmul.mubr.f32.gmra.mrb[0].mxu0 %v112
    %v185 = vpop.f32.mrb[0].mxu0
    %v186 = vadd.f32 %v106, %v185
    %v187 = vpop.f32.mrb[0].mxu0
    %188 = vdwg.mxu0
    %vm189 = vcmask 785408
    %190 = vst.msk [vmem:[#allocation7] sm:$0xff] %vm189, %v181
    %191 = vst.msk [vmem:[#allocation7 + $0x8] sm:$0xff] %vm189, %v186
    // Predicated region
    $region30: #{tpu_custom_call.1} parent=1 // pred_check
      _
    $region31: #{tpu_custom_call.1} parent=1 // pred_check_branch
      %193 = sbr.rel (0) target = $region33
    $region32: #{tpu_custom_call.1} parent=1 // pred_region
      %s195 = ssub.s32 256, 256
      %196 = vsyncadd [#allocation4], %s195
      %s197 = sshll.u32 [#allocation7], 4
      %s198 = int_to_ptr.vmem [resolvable:$true] %s197
      %203 = dma.vmem_to_hbm [thread:$0]  %s198, 256, %s5, [#allocation4], 128, 128, 8
    $region33: #{tpu_custom_call.1} parent=1 // pred_fallthru
      _
    // Predicated region
    $region34: #{tpu_custom_call.1} parent=1 // pred_check
      _
    $region35: #{tpu_custom_call.1} parent=1 // pred_check_branch
      %205 = sbr.rel (0) target = $region37
    $region36: #{tpu_custom_call.1} parent=1 // pred_region
      %206 = dma.done [#allocation4], 256
    $region37: #{tpu_custom_call.1} parent=1 // pred_fallthru
      _
    %207 = vsyncpa [#allocation3], 1
    %208 = vsyncpa [#allocation6], 1
    %209 = vsyncpa [#allocation4], 1

</llo_original>
